<compile_context>
chip_gen: v7x
topology: tpu7x:2x2x1
jax: 0.10.0
libtpu: 0.0.40
codegen_flags: <defaults>
</compile_context>

<pallas_src>
import math

import jax
import jax.numpy as jnp
from jax.experimental import pallas as pl
from jax.experimental.pallas import tpu as pltpu


# nn.Linear(2, 1): weight deterministically copied to [1., 1.] in __init__.
# TODO(synk): the Linear bias was left at PyTorch random init; fixed to 0 here.
_LIN_W = (1.0, 1.0)
_LIN_B = 0.0


def _build_kernel(n_total, w_len, f_valid, f_pad, n_blk, num_blocks):
    """Fused customLoss kernel, closed over all static shape parameters."""
    inv_sqrt_w = 1.0 / math.sqrt(w_len)          # torch.rfft(normalized=True)
    needs_row_mask = (num_blocks * n_blk != n_total)

    def kernel(ord_ref, sig_ref, true_ref, basis_ref, win_ref,
               out_ref, acc_ord, acc_reg):
        pid = pl.program_id(0)

        @pl.when(pid == 0)
        def _init():
            acc_ord[...] = jnp.zeros_like(acc_ord)
            acc_reg[...] = jnp.zeros_like(acc_reg)

        # ----- ordinal loss partial sum (native (nb, W, C) layout, no transpose) -----
        p = ord_ref[...].astype(jnp.float32)                    # (nb, W, C)
        tgt = true_ref[...].astype(jnp.int32)                   # trunc toward 0, like .int()
        k = jax.lax.broadcasted_iota(jnp.int32, p.shape, 2)     # ordinal index along C
        chosen = jnp.where(k <= tgt[:, :, None], p, 1.0 - p)    # mask_0 / mask_1 select
        # single log; the original clamp's 1e8 upper bound is a no-op for probabilities
        term = jnp.log(jnp.maximum(chosen, 1e-8))
        if needs_row_mask:
            row = pid * n_blk + jax.lax.broadcasted_iota(jnp.int32, p.shape, 0)
            term = jnp.where(row < n_total, term, 0.0)
        s = jnp.sum(term, axis=2)                               # (nb, W)
        s = jnp.sum(s, axis=1, keepdims=True)                   # (nb, 1)
        acc_ord[...] += jnp.sum(s, axis=0, keepdims=True)       # (1, 1)

        # ----- Welch spectra + regress-loss partial sum -------------------------------
        fvalid = jax.lax.broadcasted_iota(jnp.int32, (n_blk, f_pad), 1) < f_valid
        neg_big = jnp.float32(-1e30)

        def spectrum(x):
            x = x - jnp.mean(x, axis=1, keepdims=True)          # detrend
            x = (x * win_ref[...]).astype(jnp.bfloat16)         # Hann window, bf16 for MXU
            s2 = jnp.dot(x, basis_ref[...],
                         preferred_element_type=jnp.float32)    # (nb, 2*F_pad), re|im fused
            re = s2[:, :f_pad]                                  # lane-aligned slices
            im = s2[:, f_pad:]
            return jnp.sqrt(re * re + im * im) * inv_sqrt_w     # (nb, F_pad)

        sp = spectrum(sig_ref[...].astype(jnp.float32))         # predicted spectrum
        st = spectrum(true_ref[...].astype(jnp.float32))        # true spectrum

        # log-softmax of the predicted spectrum over valid frequency columns
        m_o = jnp.max(jnp.where(fvalid, sp, neg_big), axis=1, keepdims=True)
        e_o = jnp.where(fvalid, jnp.exp(sp - m_o), 0.0)
        log_o = (sp - m_o) - jnp.log(jnp.sum(e_o, axis=1, keepdims=True))

        # softmax of the true spectrum
        m_t = jnp.max(jnp.where(fvalid, st, neg_big), axis=1, keepdims=True)
        e_t = jnp.where(fvalid, jnp.exp(st - m_t), 0.0)
        t = e_t * pl.reciprocal(jnp.sum(e_t, axis=1, keepdims=True), approx=True)

        le = jnp.where(fvalid, -t * log_o, 0.0)                 # (nb, F_pad)
        if needs_row_mask:
            row2 = pid * n_blk + jax.lax.broadcasted_iota(jnp.int32, le.shape, 0)
            le = jnp.where(row2 < n_total, le, 0.0)
        sr = jnp.sum(le, axis=1, keepdims=True)                 # (nb, 1)
        acc_reg[...] += jnp.sum(sr, axis=0, keepdims=True)      # (1, 1)

        # ----- finalize: normalize both losses + Linear(2, 1) combine -----------------
        @pl.when(pid == num_blocks - 1)
        def _finalize():
            loss1 = acc_ord[...] * (-1.0 / (n_total * w_len))   # ordLoss
            loss2 = acc_reg[...] * (1.0 / (n_total * f_valid))  # regressLoss (mean)
            out_ref[...] = _LIN_W[0] * loss1 + _LIN_W[1] * loss2 + _LIN_B

    return kernel


def custom_loss(predict, true_rppg):
    """JAX/Pallas equivalent of customLoss.forward(predict, true_rPPG)."""
    # TODO(synk): Visdom plotting, pdb.set_trace() hooks and the unused
    # self.t1 = weight([2., 2.]) side computation are omitted.
    pred0, pred1 = predict                    # (N, W, C) ordinal probs, (N, W) signal
    n, w_len, n_ord = pred0.shape
    f_valid = w_len // 2 + 1                  # onesided rfft bin count
    f_pad = ((f_valid + 127) // 128) * 128    # lane-dense frequency axis

    # batch tile: whole batch if tiny, otherwise a sublane-aligned row block
    n_blk = n if n <= 8 else min(128, (n // 8) * 8)
    num_blocks = pl.cdiv(n, n_blk)

    # symmetric Hann window (scipy.signal.hann); constant-folded by XLA
    idx = jnp.arange(w_len, dtype=jnp.float32)
    win = (0.5 - 0.5 * jnp.cos(2.0 * jnp.pi * idx / (w_len - 1))).reshape(1, w_len)

    # real-DFT basis [cos | sin], zero-padded to F_pad columns, bf16 for the MXU
    w_idx = jnp.arange(w_len, dtype=jnp.float32)[:, None]
    f_idx = jnp.arange(f_pad, dtype=jnp.float32)[None, :]
    ang = 2.0 * jnp.pi * w_idx * f_idx / w_len
    col_ok = f_idx < f_valid
    cos_m = jnp.where(col_ok, jnp.cos(ang), 0.0)
    sin_m = jnp.where(col_ok, jnp.sin(ang), 0.0)
    basis = jnp.concatenate([cos_m, sin_m], axis=1).astype(jnp.bfloat16)  # (W, 2*F_pad)
    # TODO(synk): for very large W on v7x (64 MiB VMEM), tile the basis over F with an
    # extra grid axis instead of keeping the full (W, 2*F_pad) block resident.

    kernel = _build_kernel(n, w_len, f_valid, f_pad, n_blk, num_blocks)

    out = pl.pallas_call(
        kernel,
        out_shape=jax.ShapeDtypeStruct((1, 1), jnp.float32),
        grid=(num_blocks,),
        in_specs=[
            pl.BlockSpec((n_blk, w_len, n_ord), lambda i: (i, 0, 0)),  # predict[0]
            pl.BlockSpec((n_blk, w_len), lambda i: (i, 0)),            # predict[1]
            pl.BlockSpec((n_blk, w_len), lambda i: (i, 0)),            # true_rPPG
            pl.BlockSpec((w_len, 2 * f_pad), lambda i: (0, 0)),        # DFT basis (resident)
            pl.BlockSpec((1, w_len), lambda i: (0, 0)),                # Hann window (resident)
        ],
        out_specs=pl.BlockSpec((1, 1), lambda i: (0, 0)),
        scratch_shapes=[pltpu.VMEM((1, 1), jnp.float32),               # ord-loss accumulator
                        pltpu.VMEM((1, 1), jnp.float32)],              # reg-loss accumulator
        compiler_params=pltpu.CompilerParams(
            dimension_semantics=("arbitrary",),     # batch axis is a reduction (accumulators)
            vmem_limit_bytes=32 * 1024 * 1024,      # sized for v7x's 64 MiB physical VMEM
        ),
    )(pred0, pred1, true_rppg, basis, win)

    return out.reshape(1)   # same shape as the torch Linear(2, 1) output


if __name__ == "__main__":
    key = jax.random.PRNGKey(0)
    k0, k1, k2 = jax.random.split(key, 3)
    N, W, C = 2, 16, 8                               # batch, time steps, ordinal classes
    pred0 = jax.nn.sigmoid(jax.random.normal(k0, (N, W, C), dtype=jnp.float32))  # predict[0]
    pred1 = jax.random.normal(k1, (N, W), dtype=jnp.float32)                     # predict[1]
    true_rppg = jax.random.uniform(k2, (N, W), minval=0.0, maxval=float(C),
                                   dtype=jnp.float32)                            # true_rPPG
    loss = custom_loss((pred0, pred1), true_rppg)
    jax.block_until_ready(loss)
    print("KERNEL_OK")
</pallas_src>

<mosaic_0001>
module attributes {stable_mosaic.version = 11 : i64} {
  func.func @kernel(%arg0: i32, %arg1: memref<2x16x8xf32, #tpu.memory_space<vmem>>, %arg2: memref<2x16xf32, #tpu.memory_space<vmem>>, %arg3: memref<2x16xf32, #tpu.memory_space<vmem>>, %arg4: memref<16x256xbf16, #tpu.memory_space<vmem>>, %arg5: memref<1x16xf32, #tpu.memory_space<vmem>>, %arg6: memref<1x1xf32, #tpu.memory_space<vmem>>, %arg7: memref<1x1xf32, #tpu.memory_space<vmem>>, %arg8: memref<1x1xf32, #tpu.memory_space<vmem>>) attributes {dimension_semantics = [#tpu.dimension_semantics<arbitrary>], iteration_bounds = array<i64: 1>, scalar_prefetch = 0 : i64, scratch_operands = 2 : i64, tpu.core_type = #tpu.core_type<tc>, window_params = [{transform_indices = @transform_0, window_bounds = array<i64: 2, 16, 8>}, {transform_indices = @transform_1, window_bounds = array<i64: 2, 16>}, {transform_indices = @transform_2, window_bounds = array<i64: 2, 16>}, {pipeline_mode = #tpu.pipeline_mode<synchronous>, transform_indices = @transform_3, window_bounds = array<i64: 16, 256>}, {pipeline_mode = #tpu.pipeline_mode<synchronous>, transform_indices = @transform_4, window_bounds = array<i64: 1, 16>}, {pipeline_mode = #tpu.pipeline_mode<synchronous>, transform_indices = @transform_5, window_bounds = array<i64: 1, 1>}]} {
    %c0_i32 = arith.constant 0 : i32
    %0 = arith.cmpi eq, %arg0, %c0_i32 : i32
    %1 = arith.extui %0 : i1 to i32
    %c0_i32_0 = arith.constant 0 : i32
    %2 = arith.cmpi ne, %1, %c0_i32_0 : i32
    scf.if %2 {
      %cst_51 = arith.constant 0.000000e+00 : f32
      %114 = vector.broadcast %cst_51 : f32 to vector<1x1xf32>
      %c0_52 = arith.constant 0 : index
      %c0_53 = arith.constant 0 : index
      %115 = vector.load %arg7[%c0_52, %c0_53] : memref<1x1xf32, #tpu.memory_space<vmem>>, vector<1x1xf32>
      tpu.vector_store %arg7[%c0_52, %c0_53], %114 {strides = array<i32>} : memref<1x1xf32, #tpu.memory_space<vmem>>, vector<1x1xf32>,
      %cst_54 = arith.constant 0.000000e+00 : f32
      %116 = vector.broadcast %cst_54 : f32 to vector<1x1xf32>
      %c0_55 = arith.constant 0 : index
      %c0_56 = arith.constant 0 : index
      %117 = vector.load %arg8[%c0_55, %c0_56] : memref<1x1xf32, #tpu.memory_space<vmem>>, vector<1x1xf32>
      tpu.vector_store %arg8[%c0_55, %c0_56], %116 {strides = array<i32>} : memref<1x1xf32, #tpu.memory_space<vmem>>, vector<1x1xf32>,
    } else {
    }
    %c0 = arith.constant 0 : index
    %c0_1 = arith.constant 0 : index
    %c0_2 = arith.constant 0 : index
    %3 = vector.load %arg1[%c0, %c0_1, %c0_2] : memref<2x16x8xf32, #tpu.memory_space<vmem>>, vector<2x16x8xf32>
    %c0_3 = arith.constant 0 : index
    %c0_4 = arith.constant 0 : index
    %4 = vector.load %arg3[%c0_3, %c0_4] : memref<2x16xf32, #tpu.memory_space<vmem>>, vector<2x16xf32>
    %5 = arith.fptosi %4 : vector<2x16xf32> to vector<2x16xi32>
    %6 = tpu.iota {dimensions = array<i32: 2>} : vector<2x16x8xi32>
    %7 = vector.shape_cast %5 : vector<2x16xi32> to vector<2x16x1xi32>
    %8 = vector.broadcast %7 : vector<2x16x1xi32> to vector<2x16x8xi32>
    %9 = arith.cmpi sle, %6, %8 : vector<2x16x8xi32>
    %cst = arith.constant 1.000000e+00 : f32
    %10 = vector.broadcast %cst : f32 to vector<2x16x8xf32>
    %11 = arith.subf %10, %3 : vector<2x16x8xf32>
    %12 = arith.select %9, %3, %11 : vector<2x16x8xi1>, vector<2x16x8xf32>
    %cst_5 = arith.constant 9.99999993E-9 : f32
    %13 = vector.broadcast %cst_5 : f32 to vector<2x16x8xf32>
    %14 = arith.maximumf %12, %13 : vector<2x16x8xf32>
    %15 = math.log %14 : vector<2x16x8xf32>
    %cst_6 = arith.constant dense<0.000000e+00> : vector<2x16xf32>
    %16 = vector.multi_reduction <add>, %15, %cst_6 [2] : vector<2x16x8xf32> to vector<2x16xf32>
    %cst_7 = arith.constant dense<0.000000e+00> : vector<2xf32>
    %17 = vector.multi_reduction <add>, %16, %cst_7 [1] : vector<2x16xf32> to vector<2xf32>
    %18 = vector.shape_cast %17 : vector<2xf32> to vector<2x1xf32>
    %c0_8 = arith.constant 0 : index
    %c0_9 = arith.constant 0 : index
    %19 = vector.load %arg7[%c0_8, %c0_9] : memref<1x1xf32, #tpu.memory_space<vmem>>, vector<1x1xf32>
    %cst_10 = arith.constant dense<0.000000e+00> : vector<1xf32>
    %20 = vector.multi_reduction <add>, %18, %cst_10 [0] : vector<2x1xf32> to vector<1xf32>
    %21 = vector.shape_cast %20 : vector<1xf32> to vector<1x1xf32>
    %22 = arith.addf %19, %21 : vector<1x1xf32>
    %c0_11 = arith.constant 0 : index
    %c0_12 = arith.constant 0 : index
    %23 = vector.load %arg7[%c0_11, %c0_12] : memref<1x1xf32, #tpu.memory_space<vmem>>, vector<1x1xf32>
    tpu.vector_store %arg7[%c0_11, %c0_12], %22 {strides = array<i32>} : memref<1x1xf32, #tpu.memory_space<vmem>>, vector<1x1xf32>,
    %24 = tpu.iota {dimensions = array<i32: 1>} : vector<2x128xi32>
    %c9_i32 = arith.constant 9 : i32
    %25 = vector.broadcast %c9_i32 : i32 to vector<2x128xi32>
    %26 = arith.cmpi slt, %24, %25 : vector<2x128xi32>
    %c0_13 = arith.constant 0 : index
    %c0_14 = arith.constant 0 : index
    %27 = vector.load %arg2[%c0_13, %c0_14] : memref<2x16xf32, #tpu.memory_space<vmem>>, vector<2x16xf32>
    %cst_15 = arith.constant dense<0.000000e+00> : vector<2xf32>
    %28 = vector.multi_reduction <add>, %27, %cst_15 [1] : vector<2x16xf32> to vector<2xf32>
    %29 = vector.shape_cast %28 : vector<2xf32> to vector<2x1xf32>
    %cst_16 = arith.constant 1.600000e+01 : f32
    %30 = vector.broadcast %cst_16 : f32 to vector<2x1xf32>
    %31 = arith.divf %29, %30 : vector<2x1xf32>
    %32 = vector.broadcast %31 : vector<2x1xf32> to vector<2x16xf32>
    %33 = arith.subf %27, %32 : vector<2x16xf32>
    %c0_17 = arith.constant 0 : index
    %c0_18 = arith.constant 0 : index
    %34 = vector.load %arg5[%c0_17, %c0_18] : memref<1x16xf32, #tpu.memory_space<vmem>>, vector<1x16xf32>
    %35 = vector.broadcast %34 : vector<1x16xf32> to vector<2x16xf32>
    %36 = arith.mulf %33, %35 : vector<2x16xf32>
    %37 = arith.truncf %36 : vector<2x16xf32> to vector<2x16xbf16>
    %c0_19 = arith.constant 0 : index
    %c0_20 = arith.constant 0 : index
    %38 = vector.load %arg4[%c0_19, %c0_20] : memref<16x256xbf16, #tpu.memory_space<vmem>>, vector<16x256xbf16>
    %cst_21 = arith.constant dense<0.000000e+00> : vector<2x256xf32>
    %39 = tpu.matmul %37, %38, %cst_21 {dimension_numbers = #tpu.dot_dimension_numbers<[1], [0], [0], [1], [0, 0, 1, 1], [], []>} : vector<2x16xbf16>, vector<16x256xbf16>, vector<2x256xf32> -> vector<2x256xf32>
    %40 = vector.extract_strided_slice %39 {offsets = [0, 0], sizes = [2, 128], strides = [1, 1]} : vector<2x256xf32> to vector<2x128xf32>
    %41 = vector.extract_strided_slice %39 {offsets = [0, 128], sizes = [2, 128], strides = [1, 1]} : vector<2x256xf32> to vector<2x128xf32>
    %42 = arith.mulf %40, %40 : vector<2x128xf32>
    %43 = arith.mulf %41, %41 : vector<2x128xf32>
    %44 = arith.addf %42, %43 : vector<2x128xf32>
    %45 = math.sqrt %44 : vector<2x128xf32>
    %cst_22 = arith.constant 2.500000e-01 : f32
    %46 = vector.broadcast %cst_22 : f32 to vector<2x128xf32>
    %47 = arith.mulf %45, %46 : vector<2x128xf32>
    %c0_23 = arith.constant 0 : index
    %c0_24 = arith.constant 0 : index
    %48 = vector.load %arg3[%c0_23, %c0_24] : memref<2x16xf32, #tpu.memory_space<vmem>>, vector<2x16xf32>
    %cst_25 = arith.constant dense<0.000000e+00> : vector<2xf32>
    %49 = vector.multi_reduction <add>, %48, %cst_25 [1] : vector<2x16xf32> to vector<2xf32>
    %50 = vector.shape_cast %49 : vector<2xf32> to vector<2x1xf32>
    %cst_26 = arith.constant 1.600000e+01 : f32
    %51 = vector.broadcast %cst_26 : f32 to vector<2x1xf32>
    %52 = arith.divf %50, %51 : vector<2x1xf32>
    %53 = vector.broadcast %52 : vector<2x1xf32> to vector<2x16xf32>
    %54 = arith.subf %48, %53 : vector<2x16xf32>
    %c0_27 = arith.constant 0 : index
    %c0_28 = arith.constant 0 : index
    %55 = vector.load %arg5[%c0_27, %c0_28] : memref<1x16xf32, #tpu.memory_space<vmem>>, vector<1x16xf32>
    %56 = vector.broadcast %55 : vector<1x16xf32> to vector<2x16xf32>
    %57 = arith.mulf %54, %56 : vector<2x16xf32>
    %58 = arith.truncf %57 : vector<2x16xf32> to vector<2x16xbf16>
    %c0_29 = arith.constant 0 : index
    %c0_30 = arith.constant 0 : index
    %59 = vector.load %arg4[%c0_29, %c0_30] : memref<16x256xbf16, #tpu.memory_space<vmem>>, vector<16x256xbf16>
    %cst_31 = arith.constant dense<0.000000e+00> : vector<2x256xf32>
    %60 = tpu.matmul %58, %59, %cst_31 {dimension_numbers = #tpu.dot_dimension_numbers<[1], [0], [0], [1], [0, 0, 1, 1], [], []>} : vector<2x16xbf16>, vector<16x256xbf16>, vector<2x256xf32> -> vector<2x256xf32>
    %61 = vector.extract_strided_slice %60 {offsets = [0, 0], sizes = [2, 128], strides = [1, 1]} : vector<2x256xf32> to vector<2x128xf32>
    %62 = vector.extract_strided_slice %60 {offsets = [0, 128], sizes = [2, 128], strides = [1, 1]} : vector<2x256xf32> to vector<2x128xf32>
    %63 = arith.mulf %61, %61 : vector<2x128xf32>
    %64 = arith.mulf %62, %62 : vector<2x128xf32>
    %65 = arith.addf %63, %64 : vector<2x128xf32>
    %66 = math.sqrt %65 : vector<2x128xf32>
    %cst_32 = arith.constant 2.500000e-01 : f32
    %67 = vector.broadcast %cst_32 : f32 to vector<2x128xf32>
    %68 = arith.mulf %66, %67 : vector<2x128xf32>
    %cst_33 = arith.constant -1.000000e+30 : f32
    %69 = vector.broadcast %cst_33 : f32 to vector<2x128xf32>
    %70 = arith.select %26, %47, %69 : vector<2x128xi1>, vector<2x128xf32>
    %cst_34 = arith.constant dense<0xFF800000> : vector<2xf32>
    %71 = vector.multi_reduction <maximumf>, %70, %cst_34 [1] : vector<2x128xf32> to vector<2xf32>
    %72 = vector.shape_cast %71 : vector<2xf32> to vector<2x1xf32>
    %73 = vector.broadcast %72 : vector<2x1xf32> to vector<2x128xf32>
    %74 = arith.subf %47, %73 : vector<2x128xf32>
    %75 = math.exp %74 : vector<2x128xf32>
    %cst_35 = arith.constant 0.000000e+00 : f32
    %76 = vector.broadcast %cst_35 : f32 to vector<2x128xf32>
    %77 = arith.select %26, %75, %76 : vector<2x128xi1>, vector<2x128xf32>
    %78 = vector.broadcast %72 : vector<2x1xf32> to vector<2x128xf32>
    %79 = arith.subf %47, %78 : vector<2x128xf32>
    %cst_36 = arith.constant dense<0.000000e+00> : vector<2xf32>
    %80 = vector.multi_reduction <add>, %77, %cst_36 [1] : vector<2x128xf32> to vector<2xf32>
    %81 = vector.shape_cast %80 : vector<2xf32> to vector<2x1xf32>
    %82 = math.log %81 : vector<2x1xf32>
    %83 = vector.broadcast %82 : vector<2x1xf32> to vector<2x128xf32>
    %84 = arith.subf %79, %83 : vector<2x128xf32>
    %cst_37 = arith.constant -1.000000e+30 : f32
    %85 = vector.broadcast %cst_37 : f32 to vector<2x128xf32>
    %86 = arith.select %26, %68, %85 : vector<2x128xi1>, vector<2x128xf32>
    %cst_38 = arith.constant dense<0xFF800000> : vector<2xf32>
    %87 = vector.multi_reduction <maximumf>, %86, %cst_38 [1] : vector<2x128xf32> to vector<2xf32>
    %88 = vector.shape_cast %87 : vector<2xf32> to vector<2x1xf32>
    %89 = vector.broadcast %88 : vector<2x1xf32> to vector<2x128xf32>
    %90 = arith.subf %68, %89 : vector<2x128xf32>
    %91 = math.exp %90 : vector<2x128xf32>
    %cst_39 = arith.constant 0.000000e+00 : f32
    %92 = vector.broadcast %cst_39 : f32 to vector<2x128xf32>
    %93 = arith.select %26, %91, %92 : vector<2x128xi1>, vector<2x128xf32>
    %cst_40 = arith.constant dense<0.000000e+00> : vector<2xf32>
    %94 = vector.multi_reduction <add>, %93, %cst_40 [1] : vector<2x128xf32> to vector<2xf32>
    %95 = vector.shape_cast %94 : vector<2xf32> to vector<2x1xf32>
    %96 = tpu.reciprocal %95 {approx = true} : vector<2x1xf32> -> vector<2x1xf32>
    %97 = vector.broadcast %96 : vector<2x1xf32> to vector<2x128xf32>
    %98 = arith.mulf %93, %97 : vector<2x128xf32>
    %cst_41 = arith.constant 0.000000e+00 : f32
    %99 = vector.broadcast %cst_41 : f32 to vector<2x128xf32>
    %100 = arith.subf %99, %98 : vector<2x128xf32>
    %101 = arith.mulf %100, %84 : vector<2x128xf32>
    %cst_42 = arith.constant 0.000000e+00 : f32
    %102 = vector.broadcast %cst_42 : f32 to vector<2x128xf32>
    %103 = arith.select %26, %101, %102 : vector<2x128xi1>, vector<2x128xf32>
    %cst_43 = arith.constant dense<0.000000e+00> : vector<2xf32>
    %104 = vector.multi_reduction <add>, %103, %cst_43 [1] : vector<2x128xf32> to vector<2xf32>
    %105 = vector.shape_cast %104 : vector<2xf32> to vector<2x1xf32>
    %c0_44 = arith.constant 0 : index
    %c0_45 = arith.constant 0 : index
    %106 = vector.load %arg8[%c0_44, %c0_45] : memref<1x1xf32, #tpu.memory_space<vmem>>, vector<1x1xf32>
    %cst_46 = arith.constant dense<0.000000e+00> : vector<1xf32>
    %107 = vector.multi_reduction <add>, %105, %cst_46 [0] : vector<2x1xf32> to vector<1xf32>
    %108 = vector.shape_cast %107 : vector<1xf32> to vector<1x1xf32>
    %109 = arith.addf %106, %108 : vector<1x1xf32>
    %c0_47 = arith.constant 0 : index
    %c0_48 = arith.constant 0 : index
    %110 = vector.load %arg8[%c0_47, %c0_48] : memref<1x1xf32, #tpu.memory_space<vmem>>, vector<1x1xf32>
    tpu.vector_store %arg8[%c0_47, %c0_48], %109 {strides = array<i32>} : memref<1x1xf32, #tpu.memory_space<vmem>>, vector<1x1xf32>,
    %c0_i32_49 = arith.constant 0 : i32
    %111 = arith.cmpi eq, %arg0, %c0_i32_49 : i32
    %112 = arith.extui %111 : i1 to i32
    %c0_i32_50 = arith.constant 0 : i32
    %113 = arith.cmpi ne, %112, %c0_i32_50 : i32
    scf.if %113 {
      %c0_51 = arith.constant 0 : index
      %c0_52 = arith.constant 0 : index
      %114 = vector.load %arg7[%c0_51, %c0_52] : memref<1x1xf32, #tpu.memory_space<vmem>>, vector<1x1xf32>
      %cst_53 = arith.constant -3.125000e-02 : f32
      %115 = vector.broadcast %cst_53 : f32 to vector<1x1xf32>
      %116 = arith.mulf %114, %115 : vector<1x1xf32>
      %c0_54 = arith.constant 0 : index
      %c0_55 = arith.constant 0 : index
      %117 = vector.load %arg8[%c0_54, %c0_55] : memref<1x1xf32, #tpu.memory_space<vmem>>, vector<1x1xf32>
      %cst_56 = arith.constant 0.055555556 : f32
      %118 = vector.broadcast %cst_56 : f32 to vector<1x1xf32>
      %119 = arith.mulf %117, %118 : vector<1x1xf32>
      %cst_57 = arith.constant 1.000000e+00 : f32
      %120 = vector.broadcast %cst_57 : f32 to vector<1x1xf32>
      %121 = arith.mulf %120, %116 : vector<1x1xf32>
      %cst_58 = arith.constant 1.000000e+00 : f32
      %122 = vector.broadcast %cst_58 : f32 to vector<1x1xf32>
      %123 = arith.mulf %122, %119 : vector<1x1xf32>
      %124 = arith.addf %121, %123 : vector<1x1xf32>
      %cst_59 = arith.constant 0.000000e+00 : f32
      %125 = vector.broadcast %cst_59 : f32 to vector<1x1xf32>
      %126 = arith.addf %124, %125 : vector<1x1xf32>
      %c0_60 = arith.constant 0 : index
      %c0_61 = arith.constant 0 : index
      %127 = vector.load %arg6[%c0_60, %c0_61] : memref<1x1xf32, #tpu.memory_space<vmem>>, vector<1x1xf32>
      tpu.vector_store %arg6[%c0_60, %c0_61], %126 {strides = array<i32>} : memref<1x1xf32, #tpu.memory_space<vmem>>, vector<1x1xf32>,
    } else {
    }
    return
  }
  func.func @transform_0(%arg0: i32) -> (i32, i32, i32) {
    %c0_i32 = arith.constant 0 : i32
    %c0_i32_0 = arith.constant 0 : i32
    %c0_i32_1 = arith.constant 0 : i32
    return %arg0, %c0_i32, %c0_i32_0 : i32, i32, i32
  }
  func.func @transform_1(%arg0: i32) -> (i32, i32) {
    %c0_i32 = arith.constant 0 : i32
    %c0_i32_0 = arith.constant 0 : i32
    return %arg0, %c0_i32 : i32, i32
  }
  func.func @transform_2(%arg0: i32) -> (i32, i32) {
    %c0_i32 = arith.constant 0 : i32
    %c0_i32_0 = arith.constant 0 : i32
    return %arg0, %c0_i32 : i32, i32
  }
  func.func @transform_3(%arg0: i32) -> (i32, i32) {
    %c0_i32 = arith.constant 0 : i32
    %c0_i32_0 = arith.constant 0 : i32
    %c0_i32_1 = arith.constant 0 : i32
    return %c0_i32, %c0_i32_0 : i32, i32
  }
  func.func @transform_4(%arg0: i32) -> (i32, i32) {
    %c0_i32 = arith.constant 0 : i32
    %c0_i32_0 = arith.constant 0 : i32
    %c0_i32_1 = arith.constant 0 : i32
    return %c0_i32, %c0_i32_0 : i32, i32
  }
  func.func @transform_5(%arg0: i32) -> (i32, i32) {
    %c0_i32 = arith.constant 0 : i32
    %c0_i32_0 = arith.constant 0 : i32
    %c0_i32_1 = arith.constant 0 : i32
    return %c0_i32, %c0_i32_0 : i32, i32
  }
}

</mosaic_0001>

<llo_original>
// kernel: tpu_custom_call.1
$region0: #{tpu_custom_call.1}
  #allocation0 [shape = 'u32[]', space=smem, size = 0x4, offset = 0x4, fixed_abs, tag = 'smem constant byte address 0x4 - core index']
  #allocation1 [shape = 'u32[144,128]{1,0:T(1,128)}', space=vmem, size = 0x12000, scoped, tag = 'internal scratch']
  #allocation2 [shape = 'f32[1,1]{1,0:T(1,128)}', space=vmem, size = 0x200, scoped, tag = 'scratch operand']
  #allocation3 [shape = 'f32[1,1]{1,0:T(1,128)}', space=vmem, size = 0x200, scoped, tag = 'scratch operand']
  %s0 = inlined_call_operand.vmem [shape: f32[2,16,8], index: 0, kind: input, shape index: {}]
  %s1 = inlined_call_operand.vmem [shape: f32[2,16], index: 1, kind: input, shape index: {}]
  %s2 = inlined_call_operand.vmem [shape: f32[2,16], index: 2, kind: input, shape index: {}]
  %s3 = inlined_call_operand.vmem [shape: bf16[16,256], index: 3, kind: input, shape index: {}]
  %s4 = inlined_call_operand.vmem [shape: f32[1,16], index: 4, kind: input, shape index: {}]
  %s5 = inlined_call_operand.hbm [shape: f32[1,1], index: 5, kind: output, shape index: {}]
  %s6 = sld [smem:[#allocation0]]
  $region38: #{tpu_custom_call.1} parent=0
    _
  %s8 = ssub.s32 1, %s6
  %s9 = scalar_select 0, %s8, %s6
  $region1: #{tpu_custom_call.1} parent=0
    #allocation4 [shape = 'u8[512]{0}', space=vmem, size = 0x400, scoped, tag = 'output window, operand 0, single buffered']
    #allocation5 [shape = 's32[1]{0}', space=sflag, size = 0x4, scoped, tag = 'scoped memory for tpu_custom_call.1']
    %10 = vsyncpa [#allocation5], 0
    // Predicated region
    $region2: #{tpu_custom_call.1} parent=1 // pred_check
      _
    $region3: #{tpu_custom_call.1} parent=1 // pred_check_branch
      %12 = sbr.rel (0) target = $region5
    $region4: #{tpu_custom_call.1} parent=1 // pred_region
      _
    $region5: #{tpu_custom_call.1} parent=1 // pred_fallthru
      _
    // Predicated region
    $region6: #{tpu_custom_call.1} parent=1 // pred_check
      _
    $region7: #{tpu_custom_call.1} parent=1 // pred_check_branch
      %14 = sbr.rel (0) target = $region9
    $region8: #{tpu_custom_call.1} parent=1 // pred_region
      _
    $region9: #{tpu_custom_call.1} parent=1 // pred_fallthru
      _
    // Predicated region
    $region10: #{tpu_custom_call.1} parent=1 // pred_check
      _
    $region11: #{tpu_custom_call.1} parent=1 // pred_check_branch
      %16 = sbr.rel (0) target = $region13
    $region12: #{tpu_custom_call.1} parent=1 // pred_region
      _
    $region13: #{tpu_custom_call.1} parent=1 // pred_fallthru
      _
    // Predicated region
    $region14: #{tpu_custom_call.1} parent=1 // pred_check
      _
    $region15: #{tpu_custom_call.1} parent=1 // pred_check_branch
      %18 = sbr.rel (0) target = $region17
    $region16: #{tpu_custom_call.1} parent=1 // pred_region
      _
    $region17: #{tpu_custom_call.1} parent=1 // pred_fallthru
      _
    // Predicated region
    $region18: #{tpu_custom_call.1} parent=1 // pred_check
      _
    $region19: #{tpu_custom_call.1} parent=1 // pred_check_branch
      %20 = sbr.rel (0) target = $region21
    $region20: #{tpu_custom_call.1} parent=1 // pred_region
      _
    $region21: #{tpu_custom_call.1} parent=1 // pred_fallthru
      _
    %p22 = scmp.eq.s32.totalorder 0, 0
    // Predicated region
    $region22: #{tpu_custom_call.1} parent=1 // pred_check
      %p23 = pneg %p22
    $region23: #{tpu_custom_call.1} parent=1 // pred_check_branch
      %25 = sbr.rel (%p23) target = $region25
    $region24: #{tpu_custom_call.1} parent=1 // pred_region
      %vm26 = vcmask 0
      %27 = vst.msk [vmem:[#allocation2] sm:$0x1] %vm26, 0.0
      %28 = vst.msk [vmem:[#allocation3] sm:$0x1] %vm26, 0.0
    $region25: #{tpu_custom_call.1} parent=1 // pred_fallthru
      _
    %v29 = vld [vmem:[%s0] sm:$0xff]
    %v30 = vld [vmem:[%s0 + $0x8] sm:$0xff]
    %v31 = vld [vmem:[%s0 + $0x10] sm:$0xff]
    %v32 = vld [vmem:[%s0 + $0x18] sm:$0xff]
    %v33 = vld [vmem:[%s2] sm:$0x3]
    %v34 = vcvt.f32.s32.to.zero.pseudo %v33
    %v35 = vlaneseq
    %v36 = vand.u32 %v35, 127
    %v37 = vlaneseq
    %v38 = vshrl.u32 %v37, 7
    %v39 = vsub.s32 0, %v38
    %v40 = vrot.slane %v34, %v39
    %42 = vbcast.lane.b32.xlu0 %v40, 256
    %v43 = vpop.permute.xlu0 %42
    %s45 = sor.u32 256, 8
    %46 = vbcast.lane.b32.xlu0 %v40, %s45
    %v47 = vpop.permute.xlu0 %46
    %v48 = vlaneseq
    %v49 = vshrl.u32 %v48, 7
    %v50 = vsub.s32 1, %v49
    %v51 = vrot.slane %v34, %v50
    %53 = vbcast.lane.b32.xlu0 %v51, 256
    %v54 = vpop.permute.xlu0 %53
    %s56 = sor.u32 256, 8
    %57 = vbcast.lane.b32.xlu0 %v51, %s56
    %v58 = vpop.permute.xlu0 %57
    %vm59 = vcmp.le.s32.totalorder %v36, %v43
    %vm60 = vcmp.le.s32.totalorder %v36, %v47
    %vm61 = vcmp.le.s32.totalorder %v36, %v54
    %vm62 = vcmp.le.s32.totalorder %v36, %v58
    %v63 = vsub.f32 1.0, %v29
    %v64 = vsub.f32 1.0, %v30
    %v65 = vsub.f32 1.0, %v31
    %v66 = vsub.f32 1.0, %v32
    %v67 = vsel %vm59, %v29, %v63
    %v68 = vsel %vm60, %v30, %v64
    %v69 = vsel %vm61, %v31, %v65
    %v70 = vsel %vm62, %v32, %v66
    %v71 = vmax.f32 %v67, 1e-08
    %v72 = vmax.f32 %v68, 1e-08
    %v73 = vmax.f32 %v69, 1e-08
    %v74 = vmax.f32 %v70, 1e-08
    %v75 = vlog2.pop %v71
    %v76 = vmul.f32 %v75, 0.6931472
    %v77 = vlog2.pop %v72
    %v78 = vmul.f32 %v77, 0.6931472
    %v79 = vlog2.pop %v73
    %v80 = vmul.f32 %v79, 0.6931472
    %v81 = vlog2.pop %v74
    %v82 = vmul.f32 %v81, 0.6931472
    %vm83 = vcmask 64512
    %v84 = vsel %vm83, %v76, 0.0
    %85 = vadd.xlane.f32.xlu0 %v84
    %v86 = vpop.xlane.xlu0 %85
    %v87 = vsel %vm83, %v78, 0.0
    %88 = vadd.xlane.f32.xlu0 %v87
    %v89 = vpop.xlane.xlu0 %88
    %v90 = vsel %vm83, %v80, 0.0
    %91 = vadd.xlane.f32.xlu0 %v90
    %v92 = vpop.xlane.xlu0 %91
    %v93 = vsel %vm83, %v82, 0.0
    %94 = vadd.xlane.f32.xlu0 %v93
    %v95 = vpop.xlane.xlu0 %94
    %v100 = vlaneseq
    %v101 = vshrl.u32 %v100, 7
    %v102 = vsub.s32 %v36, %v101
    %v103 = vrot.slane %v86, %v102
    %v104 = vadd.s32 %v36, 4294967288
    %v105 = vlaneseq
    %v106 = vshrl.u32 %v105, 7
    %v107 = vsub.s32 %v104, %v106
    %v108 = vrot.slane %v89, %v107
    %vm109 = vcmask 130112
    %v110 = vsel %vm109, %v108, %v103
    %v111 = vlaneseq
    %v112 = vshrl.u32 %v111, 7
    %v113 = vsub.s32 %v36, %v112
    %v114 = vrot.slane %v92, %v113
    %v115 = vlaneseq
    %v116 = vshrl.u32 %v115, 7
    %v117 = vsub.s32 %v104, %v116
    %v118 = vrot.slane %v95, %v117
    %v119 = vsel %vm109, %v118, %v114
    %vm120 = vcmask 1041409
    %v121 = vsel %vm120, %v119, %v110
    %vm123 = vcmask 123904
    %v124 = vsel %vm123, %v121, 0.0
    %125 = vadd.xlane.f32.xlu0 %v124
    %v126 = vpop.xlane.xlu0 %125
    %v127 = vld [vmem:[#allocation2] sm:$0x1]
    %vm128 = vcmask 1041408
    %v129 = vsel %vm128, %v126, 0.0
    %v130 = vrot.slane %v129, 4
    %v131 = vadd.f32 %v129, %v130
    %v132 = vrot.slane %v131, 2
    %v133 = vadd.f32 %v131, %v132
    %v134 = vrot.slane %v133, 1
    %v135 = vadd.f32 %v133, %v134
    %v136 = vadd.f32 %v127, %v135
    %vm137 = vcmask 0
    %138 = vst.msk [vmem:[#allocation2] sm:$0x1] %vm137, %v136
    %vm139 = vcmp.lt.s32.totalorder %v36, 9
    %v140 = vld [vmem:[%s1] sm:$0x3]
    %v141 = vsel %vm123, %v140, 0.0
    %142 = vadd.xlane.f32.xlu0 %v141
    %v143 = vpop.xlane.xlu0 %142
    %v144 = vrcp.pop 16.0
    %v145 = vmul.f32 %v143, %v144
    %v146 = vsub.f32 %v140, %v145
    %v147 = vld [vmem:[%s4] sm:$0x1]
    %v149 = vlaneseq
    %v150 = vshrl.u32 %v149, 7
    %v151 = vsub.s32 0, %v150
    %v152 = vrot.slane %v147, %v151
    %v154 = vmul.f32 %v146, %v152
    %v155 = vpack.c.bf16 %v154, %v154
    %v156 = vld [vmem:[%s3] sm:$0xff]
    %v157 = vld [vmem:[%s3 + $0x8] sm:$0xff]
    %v160 = vunpack.c.l.b16 %v156
    %v161 = vunpack.c.h.b16 %v156
    %v162 = vunpack.c.l.b16 %v157
    %v163 = vunpack.c.h.b16 %v157
    %v164 = vpack.c.b16 %v162, %v160
    %v165 = vpack.c.b16 %v163, %v161
    %vm168 = vcmask 130048
    %v170 = vsel %vm168, %v155, 0
    %172 = vmatprep.subr.bf16.mxu0 %v165
    %173 = vmatpush1.bf16.msra.mxu0 %v164
    %174 = vmatprep.subr.bf16.mxu0 0
    %175 = vmatpush1.bf16.msra.mxu0 0
    %176 = vmatprep.subr.bf16.mxu0 0
    %177 = vmatpush1.bf16.msra.mxu0 0
    %178 = vmatprep.subr.bf16.mxu0 0
    %179 = vmatpush1.bf16.msra.mxu0 0
    %180 = vmatprep.subr.bf16.mxu0 0
    %181 = vmatpush1.bf16.msra.mxu0 0
    %182 = vmatprep.subr.bf16.mxu0 0
    %183 = vmatpush1.bf16.msra.mxu0 0
    %184 = vmatprep.subr.bf16.mxu0 0
    %185 = vmatpush1.bf16.msra.mxu0 0
    %186 = vmatprep.subr.bf16.mxu0 0
    %187 = vmatpush1.bf16.msra.mxu0 0
    %188 = vmatprep.subr.bf16.mxu0 0
    %189 = vmatpush1.bf16.msra.mxu0 0
    %190 = vmatprep.subr.bf16.mxu0 0
    %191 = vmatpush1.bf16.msra.mxu0 0
    %192 = vmatprep.subr.bf16.mxu0 0
    %193 = vmatpush1.bf16.msra.mxu0 0
    %194 = vmatprep.subr.bf16.mxu0 0
    %195 = vmatpush1.bf16.msra.mxu0 0
    %196 = vmatprep.subr.bf16.mxu0 0
    %197 = vmatpush1.bf16.msra.mxu0 0
    %198 = vmatprep.subr.bf16.mxu0 0
    %199 = vmatpush1.bf16.msra.mxu0 0
    %200 = vmatprep.subr.bf16.mxu0 0
    %201 = vmatpush1.bf16.msra.mxu0 0
    %202 = vmatprep.subr.bf16.mxu0 0
    %203 = vmatpush1.bf16.msra.mxu0 0
    %204 = vmatprep.mubr.bf16.mxu0 0
    %205 = vmatmul.mubr.bf16.gmra.mrb[0].mxu0 %v170
    %v206 = vpop.f32.mrb[0].mxu0
    %v207 = vadd.f32 0.0, %v206
    %v208 = vpop.f32.mrb[0].mxu0
    %v209 = vadd.f32 0.0, %v208
    %v210 = vpop.f32.mrb[0].mxu0
    %v211 = vpop.f32.mrb[0].mxu0
    %212 = vdwg.mxu0
    %v213 = vmul.f32 %v207, %v207
    %v214 = vmul.f32 %v209, %v209
    %v215 = vadd.f32 %v213, %v214
    %v216 = vrsqrt.pop %v215
    %v217 = vmul.f32 %v215, %v216
    %vm218 = vcmp.eq.f32.partialorder %v215, inf
    %v219 = vsel %vm218, %v215, %v217
    %vm220 = vcmp.eq.f32.partialorder %v215, 0.0
    %v221 = vand.u32 %v215, 2147483648
    %v222 = vsel %vm220, %v221, %v219
    %v223 = vmul.f32 %v222, 0.25
    %v224 = vld [vmem:[%s2] sm:$0x3]
    %v225 = vsel %vm123, %v224, 0.0
    %226 = vadd.xlane.f32.xlu0 %v225
    %v227 = vpop.xlane.xlu0 %226
    %v228 = vmul.f32 %v227, %v144
    %v229 = vsub.f32 %v224, %v228
    %v230 = vmul.f32 %v229, %v152
    %v231 = vpack.c.bf16 %v230, %v230
    %v233 = vsel %vm168, %v231, 0
    %235 = vmatprep.subr.bf16.mxu0 %v165
    %236 = vmatpush1.bf16.msra.mxu0 %v164
    %237 = vmatprep.subr.bf16.mxu0 0
    %238 = vmatpush1.bf16.msra.mxu0 0
    %239 = vmatprep.subr.bf16.mxu0 0
    %240 = vmatpush1.bf16.msra.mxu0 0
    %241 = vmatprep.subr.bf16.mxu0 0
    %242 = vmatpush1.bf16.msra.mxu0 0
    %243 = vmatprep.subr.bf16.mxu0 0
    %244 = vmatpush1.bf16.msra.mxu0 0
    %245 = vmatprep.subr.bf16.mxu0 0
    %246 = vmatpush1.bf16.msra.mxu0 0
    %247 = vmatprep.subr.bf16.mxu0 0
    %248 = vmatpush1.bf16.msra.mxu0 0
    %249 = vmatprep.subr.bf16.mxu0 0
    %250 = vmatpush1.bf16.msra.mxu0 0
    %251 = vmatprep.subr.bf16.mxu0 0
    %252 = vmatpush1.bf16.msra.mxu0 0
    %253 = vmatprep.subr.bf16.mxu0 0
    %254 = vmatpush1.bf16.msra.mxu0 0
    %255 = vmatprep.subr.bf16.mxu0 0
    %256 = vmatpush1.bf16.msra.mxu0 0
    %257 = vmatprep.subr.bf16.mxu0 0
    %258 = vmatpush1.bf16.msra.mxu0 0
    %259 = vmatprep.subr.bf16.mxu0 0
    %260 = vmatpush1.bf16.msra.mxu0 0
    %261 = vmatprep.subr.bf16.mxu0 0
    %262 = vmatpush1.bf16.msra.mxu0 0
    %263 = vmatprep.subr.bf16.mxu0 0
    %264 = vmatpush1.bf16.msra.mxu0 0
    %265 = vmatprep.subr.bf16.mxu0 0
    %266 = vmatpush1.bf16.msra.mxu0 0
    %267 = vmatprep.mubr.bf16.mxu0 0
    %268 = vmatmul.mubr.bf16.gmra.mrb[0].mxu0 %v233
    %v269 = vpop.f32.mrb[0].mxu0
    %v270 = vadd.f32 0.0, %v269
    %v271 = vpop.f32.mrb[0].mxu0
    %v272 = vadd.f32 0.0, %v271
    %v273 = vpop.f32.mrb[0].mxu0
    %v274 = vpop.f32.mrb[0].mxu0
    %275 = vdwg.mxu0
    %v276 = vmul.f32 %v270, %v270
    %v277 = vmul.f32 %v272, %v272
    %v278 = vadd.f32 %v276, %v277
    %v279 = vrsqrt.pop %v278
    %v280 = vmul.f32 %v278, %v279
    %vm281 = vcmp.eq.f32.partialorder %v278, inf
    %v282 = vsel %vm281, %v278, %v280
    %vm283 = vcmp.eq.f32.partialorder %v278, 0.0
    %v284 = vand.u32 %v278, 2147483648
    %v285 = vsel %vm283, %v284, %v282
    %v286 = vmul.f32 %v285, 0.25
    %v287 = vsel %vm139, %v223, -1e+30
    %v288 = vsel %vm128, %v287, -inf
    %289 = vmax.xlane.f32.xlu0 %v288
    %v290 = vpop.xlane.xlu0 %289
    %v291 = vsub.f32 %v223, %v290
    %v292 = vmul.f32 %v291, 1.442695
    %v293 = vpow.pop %v292
    %v294 = vsel %vm139, %v293, 0.0
    %v295 = vsel %vm128, %v294, 0.0
    %296 = vadd.xlane.f32.xlu0 %v295
    %v297 = vpop.xlane.xlu0 %296
    %v298 = vlog2.pop %v297
    %v299 = vmul.f32 %v298, 0.6931472
    %v300 = vsub.f32 %v291, %v299
    %v301 = vsel %vm139, %v286, -1e+30
    %v302 = vsel %vm128, %v301, -inf
    %303 = vmax.xlane.f32.xlu0 %v302
    %v304 = vpop.xlane.xlu0 %303
    %v305 = vsub.f32 %v286, %v304
    %v306 = vmul.f32 %v305, 1.442695
    %v307 = vpow.pop %v306
    %v308 = vsel %vm139, %v307, 0.0
    %v309 = vsel %vm128, %v308, 0.0
    %310 = vadd.xlane.f32.xlu0 %v309
    %v311 = vpop.xlane.xlu0 %310
    %v312 = vrcp.pop %v311
    %v313 = vmul.f32 %v308, %v312
    %v314 = vsub.f32 0.0, %v313
    %v315 = vmul.f32 %v314, %v300
    %v316 = vsel %vm139, %v315, 0.0
    %v317 = vsel %vm128, %v316, 0.0
    %318 = vadd.xlane.f32.xlu0 %v317
    %v319 = vpop.xlane.xlu0 %318
    %v320 = vld [vmem:[#allocation3] sm:$0x1]
    %v321 = vsel %vm128, %v319, 0.0
    %v322 = vrot.slane %v321, 4
    %v323 = vadd.f32 %v321, %v322
    %v324 = vrot.slane %v323, 2
    %v325 = vadd.f32 %v323, %v324
    %v326 = vrot.slane %v325, 1
    %v327 = vadd.f32 %v325, %v326
    %v328 = vadd.f32 %v320, %v327
    %329 = vst.msk [vmem:[#allocation3] sm:$0x1] %vm137, %v328
    // Predicated region
    $region26: #{tpu_custom_call.1} parent=1 // pred_check
      %p330 = pneg %p22
    $region27: #{tpu_custom_call.1} parent=1 // pred_check_branch
      %332 = sbr.rel (%p330) target = $region29
    $region28: #{tpu_custom_call.1} parent=1 // pred_region
      %v333 = vld [vmem:[#allocation2] sm:$0x1]
      %v334 = vmul.f32 %v333, -0.03125
      %v335 = vld [vmem:[#allocation3] sm:$0x1]
      %v336 = vmul.f32 %v335, 0.055555556
      %v337 = vadd.f32 %v334, %v336
      %v338 = vadd.f32 %v337, 0.0
      %339 = vst.msk [vmem:[#allocation4] sm:$0x1] %vm137, %v338
    $region29: #{tpu_custom_call.1} parent=1 // pred_fallthru
      _
    // Predicated region
    $region30: #{tpu_custom_call.1} parent=1 // pred_check
      _
    $region31: #{tpu_custom_call.1} parent=1 // pred_check_branch
      %341 = sbr.rel (0) target = $region33
    $region32: #{tpu_custom_call.1} parent=1 // pred_region
      %s343 = ssub.s32 16, 16
      %344 = vsyncadd [#allocation5], %s343
      %s346 = sshll.u32 [#allocation4], 4
      %s347 = int_to_ptr.vmem [resolvable:$true] %s346
      %349 = dma.vmem_to_hbm [thread:$0]  %s347, 16, %s5, [#allocation5]
    $region33: #{tpu_custom_call.1} parent=1 // pred_fallthru
      _
    // Predicated region
    $region34: #{tpu_custom_call.1} parent=1 // pred_check
      _
    $region35: #{tpu_custom_call.1} parent=1 // pred_check_branch
      %351 = sbr.rel (0) target = $region37
    $region36: #{tpu_custom_call.1} parent=1 // pred_region
      %352 = dma.done [#allocation5], 16
    $region37: #{tpu_custom_call.1} parent=1 // pred_fallthru
      _
    %353 = vsyncpa [#allocation5], 1

</llo_original>
